<compile_context>
chip_gen: v7x
topology: tpu7x:2x2x1
jax: 0.10.0
libtpu: 0.0.40
codegen_flags: <defaults>
</compile_context>

<pallas_src>
import functools

import jax
import jax.numpy as jnp
from jax.experimental import pallas as pl
from jax.experimental.pallas import tpu as pltpu

_MAX_LANES = 4096   # cap lane width so `rows` stays large enough to tile
_MIN_STEPS = 8      # keep at least this many grid steps on large arrays


def _copy_kernel(x_ref, o_ref):
    # Elementwise pass-through (full-vreg load + unmasked lane-dense store).
    o_ref[...] = x_ref[...]


def _pick_lanes(total: int) -> int:
    """Largest multiple of 128 (<= _MAX_LANES) that divides `total`, else 0."""
    if total % 128 != 0:
        return 0
    for k in range(_MAX_LANES // 128, 0, -1):
        cand = 128 * k
        if total % cand == 0:
            return cand
    return 128  # unreachable: total % 128 == 0 implies 128 divides total


def _hw_config():
    """Per-generation (tile_bytes, vmem_limit_bytes) from physical VMEM."""
    try:
        vmem_cap = pltpu.get_tpu_info().vmem_capacity_bytes
    except Exception:  # pragma: no cover - e.g. interpret mode / no TPU info
        vmem_cap = 64 * 1024 * 1024
    # ~1/16 of VMEM per tile: 4 MiB on v7x (64 MiB), 8 MiB on v5e/v6e (128 MiB).
    tile_bytes = max(vmem_cap // 16, 2 * 1024 * 1024)
    # Scoped budget: room for 4 double-buffered tiles plus slack, capped well
    # below physical VMEM on every generation.
    vmem_limit = min((vmem_cap * 3) // 4, 8 * tile_bytes)
    return tile_bytes, vmem_limit


def _resnet_forward_pallas(x: jax.Array) -> jax.Array:
    orig_shape = x.shape
    total = x.size
    itemsize = jnp.dtype(x.dtype).itemsize

    lanes = _pick_lanes(total)
    padded = False
    if lanes == 0:
        # Rare tail case: element count not a multiple of 128.  Pad to a
        # lane-dense slab; the padded slab is a fresh intermediate, so
        # aliasing it into the output is free (no defensive copy).
        lanes = 1024 if total >= 1024 else 128
        flat = x.reshape(-1)
        flat = jnp.pad(flat, (0, (-total) % lanes))
        x2d = flat.reshape(-1, lanes)
        padded = True
    else:
        # Pure reshape (metadata only) -> no extra HBM traffic.
        x2d = x.reshape(-1, lanes)
    rows = x2d.shape[0]

    tile_bytes, vmem_limit = _hw_config()
    row_bytes = lanes * itemsize

    if rows <= 8:
        tile_r = rows  # full extent: always a legal block shape
    else:
        big_tile_rows = max(8, (tile_bytes // row_bytes) // 8 * 8)
        # Cap the tile so large arrays keep >= _MIN_STEPS grid steps
        # (pipeline overlap + 2-TensorCore sharding on v7x).
        steps_cap = max(8, ((pl.cdiv(rows, _MIN_STEPS) + 7) // 8) * 8)
        tile_r = min(big_tile_rows, steps_cap, rows)

    grid = (pl.cdiv(rows, tile_r),)

    extra_kwargs = {}
    if padded:
        extra_kwargs["input_output_aliases"] = {0: 0}

    out2d = pl.pallas_call(
        _copy_kernel,
        out_shape=jax.ShapeDtypeStruct(x2d.shape, x2d.dtype),
        grid=grid,
        in_specs=[pl.BlockSpec((tile_r, lanes), lambda i: (i, 0))],
        out_specs=pl.BlockSpec((tile_r, lanes), lambda i: (i, 0)),
        compiler_params=pltpu.CompilerParams(
            # Copy tiles are fully independent -> shard across TensorCores.
            dimension_semantics=("parallel",),
            vmem_limit_bytes=int(vmem_limit),
        ),
        # Pure memory traffic: one read + one write of the tensor.
        cost_estimate=pl.CostEstimate(
            flops=0,
            transcendentals=0,
            bytes_accessed=2 * total * itemsize,
        ),
        **extra_kwargs,
    )(x2d)

    if padded:
        return out2d.reshape(-1)[:total].reshape(orig_shape)
    return out2d.reshape(orig_shape)


@functools.partial(jax.jit, static_argnames=("min_bytes_for_pallas",))
def resnet_forward(x: jax.Array, min_bytes_for_pallas: int = 0) -> jax.Array:
    """Forward of the (empty) ResNet module: identity over the input tensor.

    For inputs smaller than `min_bytes_for_pallas` (a trace-time decision),
    skip the kernel entirely and return x — a no-op is strictly faster than
    any copy.  Default 0 keeps the Pallas path active for this demo.
    """
    nbytes = x.size * jnp.dtype(x.dtype).itemsize
    if nbytes < min_bytes_for_pallas:
        return x
    return _resnet_forward_pallas(x)


if __name__ == "__main__":
    key = jax.random.PRNGKey(0)
    # NCHW input, small shapes: batch=2, channels=4, spatial=16x16.
    x = jax.random.normal(key, (2, 4, 16, 16), dtype=jnp.float32)

    y = resnet_forward(x)
    jax.block_until_ready(y)

    # Correctness check against the only defined semantics (identity).
    assert y.shape == x.shape
    assert jnp.allclose(y, x), "identity pass-through mismatch"

    print("KERNEL_OK")
</pallas_src>

<mosaic_0001>
module attributes {stable_mosaic.version = 11 : i64} {
  func.func @_copy_kernel(%arg0: i32, %arg1: memref<1x2048xf32, #tpu.memory_space<vmem>>, %arg2: memref<1x2048xf32, #tpu.memory_space<vmem>>) attributes {dimension_semantics = [#tpu.dimension_semantics<parallel>], iteration_bounds = array<i64: 1>, scalar_prefetch = 0 : i64, scratch_operands = 0 : i64, tpu.core_type = #tpu.core_type<tc>, window_params = [{transform_indices = @transform_0, window_bounds = array<i64: 1, 2048>}, {transform_indices = @transform_1, window_bounds = array<i64: 1, 2048>}]} {
    %c0 = arith.constant 0 : index
    %c0_0 = arith.constant 0 : index
    %0 = vector.load %arg1[%c0, %c0_0] : memref<1x2048xf32, #tpu.memory_space<vmem>>, vector<1x2048xf32>
    %c0_1 = arith.constant 0 : index
    %c0_2 = arith.constant 0 : index
    %1 = vector.load %arg2[%c0_1, %c0_2] : memref<1x2048xf32, #tpu.memory_space<vmem>>, vector<1x2048xf32>
    tpu.vector_store %arg2[%c0_1, %c0_2], %0 {strides = array<i32>} : memref<1x2048xf32, #tpu.memory_space<vmem>>, vector<1x2048xf32>,
    return
  }
  func.func @transform_0(%arg0: i32) -> (i32, i32) {
    %c0_i32 = arith.constant 0 : i32
    %c0_i32_0 = arith.constant 0 : i32
    return %arg0, %c0_i32 : i32, i32
  }
  func.func @transform_1(%arg0: i32) -> (i32, i32) {
    %c0_i32 = arith.constant 0 : i32
    %c0_i32_0 = arith.constant 0 : i32
    return %arg0, %c0_i32 : i32, i32
  }
}

</mosaic_0001>

<llo_original>
// kernel: resnet_forward.1
$region0: #{resnet_forward.1}
  #allocation0 [shape = 'u32[]', space=smem, size = 0x4, offset = 0x4, fixed_abs, tag = 'smem constant byte address 0x4 - core index']
  #allocation1 [shape = 'u32[144,128]{1,0:T(1,128)}', space=vmem, size = 0x12000, scoped, tag = 'internal scratch']
  %s0 = inlined_call_operand.vmem [shape: f32[1,2048], index: 0, kind: input, shape index: {}]
  %s1 = inlined_call_operand.vmem [shape: f32[1,2048], index: 1, kind: output, shape index: {}]
  %s2 = sld [smem:[#allocation0]]
  $region14: #{resnet_forward.1} parent=0
    _
  %s4 = ssub.s32 1, %s2
  %s5 = scalar_select 0, %s4, %s2
  // Predicated region
  $region2: #{resnet_forward.1} parent=0 // pred_check
    _
  $region3: #{resnet_forward.1} parent=0 // pred_check_branch
    %7 = sbr.rel (0) target = $region5
  $region4: #{resnet_forward.1} parent=0 // pred_region
    _
  $region5: #{resnet_forward.1} parent=0 // pred_fallthru
    _
  %v8 = vld [vmem:[%s0] sm:$0xff]
  %v9 = vld [vmem:[%s0 + $0x8] sm:$0xff]
  %10 = vst [vmem:[%s1] sm:$0xff] %v8
  %11 = vst [vmem:[%s1 + $0x8] sm:$0xff] %v9
  // Predicated region
  $region6: #{resnet_forward.1} parent=0 // pred_check
    _
  $region7: #{resnet_forward.1} parent=0 // pred_check_branch
    %13 = sbr.rel (0) target = $region9
  $region8: #{resnet_forward.1} parent=0 // pred_region
    _
  $region9: #{resnet_forward.1} parent=0 // pred_fallthru
    _
  // Predicated region
  $region10: #{resnet_forward.1} parent=0 // pred_check
    _
  $region11: #{resnet_forward.1} parent=0 // pred_check_branch
    %15 = sbr.rel (0) target = $region13
  $region12: #{resnet_forward.1} parent=0 // pred_region
    _
  $region13: #{resnet_forward.1} parent=0 // pred_fallthru
    _

</llo_original>
